<compile_context>
chip_gen: v7x
topology: tpu7x:2x2x1
jax: 0.10.0
libtpu: 0.0.40
codegen_flags: <defaults>
</compile_context>

<pallas_src>
import functools

import jax
import jax.numpy as jnp
from jax.experimental import pallas as pl
from jax.experimental.pallas import tpu as pltpu


# ---------------------------------------------------------------------------
# Lipschitz layer weight conditioning (spectral norm via power iteration).
# TODO(synk): this is the training-time weight *conditioning* of lipschitz_layer
# (InducedNormLinear); it is O(in*out) per weight, so it runs as plain-JAX
# preprocessing rather than inside the Pallas kernel.
# ---------------------------------------------------------------------------
def spectral_normalize(w, coeff, n_iterations, key):
    """w: (in_dim, out_dim). Returns w scaled so that sigma(w) <= coeff."""
    out_dim = w.shape[1]
    u = jax.random.normal(key, (out_dim,), dtype=w.dtype)
    u = u / jnp.maximum(jnp.linalg.norm(u), 1e-12)
    for _ in range(n_iterations):
        v = w @ u
        v = v / jnp.maximum(jnp.linalg.norm(v), 1e-12)
        u = w.T @ v
        u = u / jnp.maximum(jnp.linalg.norm(u), 1e-12)
    sigma = jnp.linalg.norm(w @ u)
    factor = jnp.maximum(1.0, sigma / coeff)
    return w / factor


# ---------------------------------------------------------------------------
# FCNet parameter construction (mirrors FCNet.__init__ for the default,
# densenet=False, non-concat-activation path: Linear(C,idim) -> act ->
# Linear(idim,idim) -> act -> Linear(idim,C)).
# Weights are stored bf16 (MXU native); biases stay f32.
# ---------------------------------------------------------------------------
def build_fcnet_params(key, channel, idim=64, nhidden=2, coeff=0.98, n_iterations=5):
    dims_in = [channel] + [idim] * nhidden
    dims_out = [idim] * nhidden + [channel]
    params = []
    for d_in, d_out in zip(dims_in, dims_out):
        key, kw, ku = jax.random.split(key, 3)
        w = jax.random.normal(kw, (d_in, d_out), dtype=jnp.float32) / jnp.sqrt(
            jnp.float32(d_in)
        )
        w = spectral_normalize(w, coeff, n_iterations, ku)
        w = w.astype(jnp.bfloat16)                       # bf16 MXU path
        b = jnp.zeros((1, d_out), dtype=jnp.float32)     # f32 bias (lane-dense row)
        params.append((w, b))
    return params


# ---------------------------------------------------------------------------
# Fused Pallas kernel: the whole MLP on one batch tile.
# refs layout: (x_ref, w1, b1, w2, b2, ..., wL, bL, o_ref)
# ---------------------------------------------------------------------------
def _elu(h):
    # nn.ELU (alpha=1): h if h > 0 else exp(h) - 1   (exp goes to the EUP port)
    return jnp.where(h > 0, h, jnp.exp(jnp.minimum(h, 0.0)) - 1.0)


def make_fcnet_kernel(n_layers):
    def kernel(*refs):
        x_ref = refs[0]
        o_ref = refs[-1]
        h = x_ref[...].astype(jnp.float32)
        for l in range(n_layers):
            w = refs[1 + 2 * l][...]                      # bf16 weight (VMEM resident)
            b = refs[2 + 2 * l][...].astype(jnp.float32)  # f32 bias
            # bf16 x bf16 -> f32 accumulation on the MXU.
            h = jnp.dot(h.astype(w.dtype), w, preferred_element_type=jnp.float32) + b
            if l < n_layers - 1:
                h = _elu(h)                               # f32 on VPU/EUP
        o_ref[...] = h.astype(o_ref.dtype)

    return kernel


# ---------------------------------------------------------------------------
# Batch-tile selection: multiple of 8, prefer a divisor of B (avoids jnp.pad),
# one tile for small batches, capped so VMEM stays comfortably inside the
# default scoped limit on every chip generation.
# ---------------------------------------------------------------------------
_MAX_BM = 2048


def _choose_bm(batch):
    if batch <= _MAX_BM:
        return max(8, ((batch + 7) // 8) * 8)  # single tile; pad at most 7 rows
    # Largest multiple of 8 <= _MAX_BM that divides the batch exactly.
    start = _MAX_BM - (_MAX_BM % 8)
    for bm in range(start, 7, -8):
        if batch % bm == 0:
            return bm
    return _MAX_BM  # fall back: minimal padding on the last tile


# ---------------------------------------------------------------------------
# Wrapper: one pallas_call, grid over batch tiles of `bm` rows.
# ---------------------------------------------------------------------------
@jax.jit
def fcnet_forward(x, params):
    B, C = x.shape
    n_layers = len(params)

    bm = _choose_bm(B)
    n_tiles = pl.cdiv(B, bm)
    Bp = n_tiles * bm
    if Bp != B:
        # Only hit when B is not a multiple of 8 (or has no tile-sized divisor);
        # padding is then at most bm-1 rows.
        x = jnp.pad(x, ((0, Bp - B), (0, 0)))

    flat = []
    in_specs = [pl.BlockSpec((bm, C), lambda i: (i, 0))]
    for (w, b) in params:
        flat.extend([w, b])
        # Untiled, VMEM-resident operands: single copy, no pipeline bookkeeping.
        in_specs.append(pl.BlockSpec(memory_space=pltpu.MemorySpace.VMEM))
        in_specs.append(pl.BlockSpec(memory_space=pltpu.MemorySpace.VMEM))

    out = pl.pallas_call(
        make_fcnet_kernel(n_layers),
        out_shape=jax.ShapeDtypeStruct((Bp, C), x.dtype),
        grid=(n_tiles,),
        in_specs=in_specs,
        out_specs=pl.BlockSpec((bm, C), lambda i: (i, 0)),
        compiler_params=pltpu.CompilerParams(
            dimension_semantics=("parallel",),
        ),
    )(x, *flat)
    return out[:B]


# ---------------------------------------------------------------------------
# Pure-JAX reference mirroring the kernel's mixed precision (bf16 matmul
# operands, f32 accumulation / bias / ELU) for a tight correctness check.
# ---------------------------------------------------------------------------
def fcnet_reference(x, params):
    h = x.astype(jnp.float32)
    for l, (w, b) in enumerate(params):
        h = jnp.dot(h.astype(w.dtype), w, preferred_element_type=jnp.float32)
        h = h + b.astype(jnp.float32)
        if l < len(params) - 1:
            h = _elu(h)
    return h.astype(x.dtype)


# ---------------------------------------------------------------------------
# TODO(synk): the densenet=True branch (LipschitzDenseLayer / learnable concat),
# the concat-type activations (CLipSwish/CPila/ALCLipSiLU/CReLU doubling the
# channel count), and build_clone / build_jvp_net are not implemented — the
# script exercises the default densenet=False, 'elu', preact=False forward path.
# ---------------------------------------------------------------------------
if __name__ == "__main__":
    key = jax.random.PRNGKey(0)
    kx, kp = jax.random.split(key)

    # FCNet config: channel=4, idim=64, nhidden=2, coeff=0.98, n_iterations=5.
    B, C, IDIM, NHIDDEN = 256, 4, 64, 2
    x = jax.random.normal(kx, (B, C), dtype=jnp.float32)
    params = build_fcnet_params(kp, C, idim=IDIM, nhidden=NHIDDEN,
                                coeff=0.98, n_iterations=5)

    y = fcnet_forward(x, params)          # bm = 256 -> grid = (1,), no padding
    jax.block_until_ready(y)

    y_ref = fcnet_reference(x, params)
    assert y.shape == (B, C)
    assert jnp.allclose(y, y_ref, atol=1e-3, rtol=1e-3), "mismatch vs reference"

    print("KERNEL_OK")
</pallas_src>

<mosaic_0001>
module attributes {stable_mosaic.version = 11 : i64} {
  func.func @kernel(%arg0: i32, %arg1: memref<256x4xf32, #tpu.memory_space<vmem>>, %arg2: memref<4x64xbf16, #tpu.memory_space<vmem>>, %arg3: memref<1x64xf32, #tpu.memory_space<vmem>>, %arg4: memref<64x64xbf16, #tpu.memory_space<vmem>>, %arg5: memref<1x64xf32, #tpu.memory_space<vmem>>, %arg6: memref<64x4xbf16, #tpu.memory_space<vmem>>, %arg7: memref<1x4xf32, #tpu.memory_space<vmem>>, %arg8: memref<256x4xf32, #tpu.memory_space<vmem>>) attributes {dimension_semantics = [#tpu.dimension_semantics<parallel>], iteration_bounds = array<i64: 1>, scalar_prefetch = 0 : i64, scratch_operands = 0 : i64, tpu.core_type = #tpu.core_type<tc>, window_params = [{transform_indices = @transform_0, window_bounds = array<i64: 256, 4>}, {pipeline_mode = #tpu.pipeline_mode<synchronous>, transform_indices = @transform_1, window_bounds = array<i64: 4, 64>}, {pipeline_mode = #tpu.pipeline_mode<synchronous>, transform_indices = @transform_2, window_bounds = array<i64: 1, 64>}, {pipeline_mode = #tpu.pipeline_mode<synchronous>, transform_indices = @transform_3, window_bounds = array<i64: 64, 64>}, {pipeline_mode = #tpu.pipeline_mode<synchronous>, transform_indices = @transform_4, window_bounds = array<i64: 1, 64>}, {pipeline_mode = #tpu.pipeline_mode<synchronous>, transform_indices = @transform_5, window_bounds = array<i64: 64, 4>}, {pipeline_mode = #tpu.pipeline_mode<synchronous>, transform_indices = @transform_6, window_bounds = array<i64: 1, 4>}, {transform_indices = @transform_7, window_bounds = array<i64: 256, 4>}]} {
    %c0 = arith.constant 0 : index
    %c0_0 = arith.constant 0 : index
    %0 = vector.load %arg1[%c0, %c0_0] : memref<256x4xf32, #tpu.memory_space<vmem>>, vector<256x4xf32>
    %c0_1 = arith.constant 0 : index
    %c0_2 = arith.constant 0 : index
    %1 = vector.load %arg2[%c0_1, %c0_2] : memref<4x64xbf16, #tpu.memory_space<vmem>>, vector<4x64xbf16>
    %c0_3 = arith.constant 0 : index
    %c0_4 = arith.constant 0 : index
    %2 = vector.load %arg3[%c0_3, %c0_4] : memref<1x64xf32, #tpu.memory_space<vmem>>, vector<1x64xf32>
    %3 = arith.truncf %0 : vector<256x4xf32> to vector<256x4xbf16>
    %cst = arith.constant dense<0.000000e+00> : vector<256x64xf32>
    %4 = tpu.matmul %3, %1, %cst {dimension_numbers = #tpu.dot_dimension_numbers<[1], [0], [0], [1], [0, 0, 1, 1], [], []>} : vector<256x4xbf16>, vector<4x64xbf16>, vector<256x64xf32> -> vector<256x64xf32>
    %5 = vector.broadcast %2 : vector<1x64xf32> to vector<256x64xf32>
    %6 = arith.addf %4, %5 : vector<256x64xf32>
    %cst_5 = arith.constant 0.000000e+00 : f32
    %7 = vector.broadcast %cst_5 : f32 to vector<256x64xf32>
    %8 = arith.cmpf ogt, %6, %7 : vector<256x64xf32>
    %cst_6 = arith.constant 0.000000e+00 : f32
    %9 = vector.broadcast %cst_6 : f32 to vector<256x64xf32>
    %10 = arith.minimumf %6, %9 : vector<256x64xf32>
    %11 = math.exp %10 : vector<256x64xf32>
    %cst_7 = arith.constant 1.000000e+00 : f32
    %12 = vector.broadcast %cst_7 : f32 to vector<256x64xf32>
    %13 = arith.subf %11, %12 : vector<256x64xf32>
    %14 = arith.select %8, %6, %13 : vector<256x64xi1>, vector<256x64xf32>
    %c0_8 = arith.constant 0 : index
    %c0_9 = arith.constant 0 : index
    %15 = vector.load %arg4[%c0_8, %c0_9] : memref<64x64xbf16, #tpu.memory_space<vmem>>, vector<64x64xbf16>
    %c0_10 = arith.constant 0 : index
    %c0_11 = arith.constant 0 : index
    %16 = vector.load %arg5[%c0_10, %c0_11] : memref<1x64xf32, #tpu.memory_space<vmem>>, vector<1x64xf32>
    %17 = arith.truncf %14 : vector<256x64xf32> to vector<256x64xbf16>
    %cst_12 = arith.constant dense<0.000000e+00> : vector<256x64xf32>
    %18 = tpu.matmul %17, %15, %cst_12 {dimension_numbers = #tpu.dot_dimension_numbers<[1], [0], [0], [1], [0, 0, 1, 1], [], []>} : vector<256x64xbf16>, vector<64x64xbf16>, vector<256x64xf32> -> vector<256x64xf32>
    %19 = vector.broadcast %16 : vector<1x64xf32> to vector<256x64xf32>
    %20 = arith.addf %18, %19 : vector<256x64xf32>
    %cst_13 = arith.constant 0.000000e+00 : f32
    %21 = vector.broadcast %cst_13 : f32 to vector<256x64xf32>
    %22 = arith.cmpf ogt, %20, %21 : vector<256x64xf32>
    %cst_14 = arith.constant 0.000000e+00 : f32
    %23 = vector.broadcast %cst_14 : f32 to vector<256x64xf32>
    %24 = arith.minimumf %20, %23 : vector<256x64xf32>
    %25 = math.exp %24 : vector<256x64xf32>
    %cst_15 = arith.constant 1.000000e+00 : f32
    %26 = vector.broadcast %cst_15 : f32 to vector<256x64xf32>
    %27 = arith.subf %25, %26 : vector<256x64xf32>
    %28 = arith.select %22, %20, %27 : vector<256x64xi1>, vector<256x64xf32>
    %c0_16 = arith.constant 0 : index
    %c0_17 = arith.constant 0 : index
    %29 = vector.load %arg6[%c0_16, %c0_17] : memref<64x4xbf16, #tpu.memory_space<vmem>>, vector<64x4xbf16>
    %c0_18 = arith.constant 0 : index
    %c0_19 = arith.constant 0 : index
    %30 = vector.load %arg7[%c0_18, %c0_19] : memref<1x4xf32, #tpu.memory_space<vmem>>, vector<1x4xf32>
    %31 = arith.truncf %28 : vector<256x64xf32> to vector<256x64xbf16>
    %cst_20 = arith.constant dense<0.000000e+00> : vector<256x4xf32>
    %32 = tpu.matmul %31, %29, %cst_20 {dimension_numbers = #tpu.dot_dimension_numbers<[1], [0], [0], [1], [0, 0, 1, 1], [], []>} : vector<256x64xbf16>, vector<64x4xbf16>, vector<256x4xf32> -> vector<256x4xf32>
    %33 = vector.broadcast %30 : vector<1x4xf32> to vector<256x4xf32>
    %34 = arith.addf %32, %33 : vector<256x4xf32>
    %c0_21 = arith.constant 0 : index
    %c0_22 = arith.constant 0 : index
    %35 = vector.load %arg8[%c0_21, %c0_22] : memref<256x4xf32, #tpu.memory_space<vmem>>, vector<256x4xf32>
    tpu.vector_store %arg8[%c0_21, %c0_22], %34 {strides = array<i32>} : memref<256x4xf32, #tpu.memory_space<vmem>>, vector<256x4xf32>,
    return
  }
  func.func @transform_0(%arg0: i32) -> (i32, i32) {
    %c0_i32 = arith.constant 0 : i32
    %c0_i32_0 = arith.constant 0 : i32
    return %arg0, %c0_i32 : i32, i32
  }
  func.func @transform_1(%arg0: i32) -> (i32, i32) {
    %c0_i32 = arith.constant 0 : i32
    %c0_i32_0 = arith.constant 0 : i32
    %c0_i32_1 = arith.constant 0 : i32
    return %c0_i32, %c0_i32_0 : i32, i32
  }
  func.func @transform_2(%arg0: i32) -> (i32, i32) {
    %c0_i32 = arith.constant 0 : i32
    %c0_i32_0 = arith.constant 0 : i32
    %c0_i32_1 = arith.constant 0 : i32
    return %c0_i32, %c0_i32_0 : i32, i32
  }
  func.func @transform_3(%arg0: i32) -> (i32, i32) {
    %c0_i32 = arith.constant 0 : i32
    %c0_i32_0 = arith.constant 0 : i32
    %c0_i32_1 = arith.constant 0 : i32
    return %c0_i32, %c0_i32_0 : i32, i32
  }
  func.func @transform_4(%arg0: i32) -> (i32, i32) {
    %c0_i32 = arith.constant 0 : i32
    %c0_i32_0 = arith.constant 0 : i32
    %c0_i32_1 = arith.constant 0 : i32
    return %c0_i32, %c0_i32_0 : i32, i32
  }
  func.func @transform_5(%arg0: i32) -> (i32, i32) {
    %c0_i32 = arith.constant 0 : i32
    %c0_i32_0 = arith.constant 0 : i32
    %c0_i32_1 = arith.constant 0 : i32
    return %c0_i32, %c0_i32_0 : i32, i32
  }
  func.func @transform_6(%arg0: i32) -> (i32, i32) {
    %c0_i32 = arith.constant 0 : i32
    %c0_i32_0 = arith.constant 0 : i32
    %c0_i32_1 = arith.constant 0 : i32
    return %c0_i32, %c0_i32_0 : i32, i32
  }
  func.func @transform_7(%arg0: i32) -> (i32, i32) {
    %c0_i32 = arith.constant 0 : i32
    %c0_i32_0 = arith.constant 0 : i32
    return %arg0, %c0_i32 : i32, i32
  }
}

</mosaic_0001>

<llo_original>
// kernel: fcnet_forward.1
$region0: #{fcnet_forward.1}
  #allocation0 [shape = 'u32[]', space=smem, size = 0x4, offset = 0x4, fixed_abs, tag = 'smem constant byte address 0x4 - core index']
  #allocation1 [shape = 'u32[144,128]{1,0:T(1,128)}', space=vmem, size = 0x12000, scoped, tag = 'internal scratch']
  %s0 = inlined_call_operand.vmem [shape: f32[256,4], index: 0, kind: input, shape index: {}]
  %s1 = inlined_call_operand.vmem [shape: bf16[4,64], index: 1, kind: input, shape index: {}]
  %s2 = inlined_call_operand.vmem [shape: f32[1,64], index: 2, kind: input, shape index: {}]
  %s3 = inlined_call_operand.vmem [shape: bf16[64,64], index: 3, kind: input, shape index: {}]
  %s4 = inlined_call_operand.vmem [shape: f32[1,64], index: 4, kind: input, shape index: {}]
  %s5 = inlined_call_operand.vmem [shape: bf16[64,4], index: 5, kind: input, shape index: {}]
  %s6 = inlined_call_operand.vmem [shape: f32[1,4], index: 6, kind: input, shape index: {}]
  %s7 = inlined_call_operand.vmem [shape: f32[256,4], index: 7, kind: output, shape index: {}]
  %s8 = sld [smem:[#allocation0]]
  $region38: #{fcnet_forward.1} parent=0
    _
  %s10 = ssub.s32 1, %s8
  %s11 = scalar_select 0, %s10, %s8
  // Predicated region
  $region2: #{fcnet_forward.1} parent=0 // pred_check
    _
  $region3: #{fcnet_forward.1} parent=0 // pred_check_branch
    %13 = sbr.rel (0) target = $region5
  $region4: #{fcnet_forward.1} parent=0 // pred_region
    _
  $region5: #{fcnet_forward.1} parent=0 // pred_fallthru
    _
  // Predicated region
  $region6: #{fcnet_forward.1} parent=0 // pred_check
    _
  $region7: #{fcnet_forward.1} parent=0 // pred_check_branch
    %15 = sbr.rel (0) target = $region9
  $region8: #{fcnet_forward.1} parent=0 // pred_region
    _
  $region9: #{fcnet_forward.1} parent=0 // pred_fallthru
    _
  // Predicated region
  $region10: #{fcnet_forward.1} parent=0 // pred_check
    _
  $region11: #{fcnet_forward.1} parent=0 // pred_check_branch
    %17 = sbr.rel (0) target = $region13
  $region12: #{fcnet_forward.1} parent=0 // pred_region
    _
  $region13: #{fcnet_forward.1} parent=0 // pred_fallthru
    _
  // Predicated region
  $region14: #{fcnet_forward.1} parent=0 // pred_check
    _
  $region15: #{fcnet_forward.1} parent=0 // pred_check_branch
    %19 = sbr.rel (0) target = $region17
  $region16: #{fcnet_forward.1} parent=0 // pred_region
    _
  $region17: #{fcnet_forward.1} parent=0 // pred_fallthru
    _
  // Predicated region
  $region18: #{fcnet_forward.1} parent=0 // pred_check
    _
  $region19: #{fcnet_forward.1} parent=0 // pred_check_branch
    %21 = sbr.rel (0) target = $region21
  $region20: #{fcnet_forward.1} parent=0 // pred_region
    _
  $region21: #{fcnet_forward.1} parent=0 // pred_fallthru
    _
  // Predicated region
  $region22: #{fcnet_forward.1} parent=0 // pred_check
    _
  $region23: #{fcnet_forward.1} parent=0 // pred_check_branch
    %23 = sbr.rel (0) target = $region25
  $region24: #{fcnet_forward.1} parent=0 // pred_region
    _
  $region25: #{fcnet_forward.1} parent=0 // pred_fallthru
    _
  // Predicated region
  $region26: #{fcnet_forward.1} parent=0 // pred_check
    _
  $region27: #{fcnet_forward.1} parent=0 // pred_check_branch
    %25 = sbr.rel (0) target = $region29
  $region28: #{fcnet_forward.1} parent=0 // pred_region
    _
  $region29: #{fcnet_forward.1} parent=0 // pred_fallthru
    _
  %v27 = vld [vmem:[%s0] sm:$0xff]
  %v28 = vld [vmem:[%s0 + $0x8] sm:$0xff]
  %v29 = vld [vmem:[%s0 + $0x10] sm:$0xff]
  %v30 = vld [vmem:[%s0 + $0x18] sm:$0xff]
  %v31 = vld [vmem:[%s0 + $0x20] sm:$0xff]
  %v32 = vld [vmem:[%s0 + $0x28] sm:$0xff]
  %v33 = vld [vmem:[%s0 + $0x30] sm:$0xff]
  %v34 = vld [vmem:[%s0 + $0x38] sm:$0xff]
  %v35 = vld [vmem:[%s0 + $0x40] sm:$0xff]
  %v36 = vld [vmem:[%s0 + $0x48] sm:$0xff]
  %v37 = vld [vmem:[%s0 + $0x50] sm:$0xff]
  %v38 = vld [vmem:[%s0 + $0x58] sm:$0xff]
  %v39 = vld [vmem:[%s0 + $0x60] sm:$0xff]
  %v40 = vld [vmem:[%s0 + $0x68] sm:$0xff]
  %v41 = vld [vmem:[%s0 + $0x70] sm:$0xff]
  %v42 = vld [vmem:[%s0 + $0x78] sm:$0xff]
  %v43 = vld [vmem:[%s0 + $0x80] sm:$0xff]
  %v44 = vld [vmem:[%s0 + $0x88] sm:$0xff]
  %v45 = vld [vmem:[%s0 + $0x90] sm:$0xff]
  %v46 = vld [vmem:[%s0 + $0x98] sm:$0xff]
  %v47 = vld [vmem:[%s0 + $0xa0] sm:$0xff]
  %v48 = vld [vmem:[%s0 + $0xa8] sm:$0xff]
  %v49 = vld [vmem:[%s0 + $0xb0] sm:$0xff]
  %v50 = vld [vmem:[%s0 + $0xb8] sm:$0xff]
  %v51 = vld [vmem:[%s0 + $0xc0] sm:$0xff]
  %v52 = vld [vmem:[%s0 + $0xc8] sm:$0xff]
  %v53 = vld [vmem:[%s0 + $0xd0] sm:$0xff]
  %v54 = vld [vmem:[%s0 + $0xd8] sm:$0xff]
  %v55 = vld [vmem:[%s0 + $0xe0] sm:$0xff]
  %v56 = vld [vmem:[%s0 + $0xe8] sm:$0xff]
  %v57 = vld [vmem:[%s0 + $0xf0] sm:$0xff]
  %v58 = vld [vmem:[%s0 + $0xf8] sm:$0xff]
  %v59 = vld [vmem:[%s1] sm:$0x3]
  %v60 = vld [vmem:[%s2] sm:$0x1]
  %v61 = vpack.c.bf16 %v28, %v27
  %v62 = vpack.c.bf16 %v30, %v29
  %v63 = vpack.c.bf16 %v32, %v31
  %v64 = vpack.c.bf16 %v34, %v33
  %v65 = vpack.c.bf16 %v36, %v35
  %v66 = vpack.c.bf16 %v38, %v37
  %v67 = vpack.c.bf16 %v40, %v39
  %v68 = vpack.c.bf16 %v42, %v41
  %v69 = vpack.c.bf16 %v44, %v43
  %v70 = vpack.c.bf16 %v46, %v45
  %v71 = vpack.c.bf16 %v48, %v47
  %v72 = vpack.c.bf16 %v50, %v49
  %v73 = vpack.c.bf16 %v52, %v51
  %v74 = vpack.c.bf16 %v54, %v53
  %v75 = vpack.c.bf16 %v56, %v55
  %v76 = vpack.c.bf16 %v58, %v57
  %v78 = vlaneseq
  %v79 = vshrl.u32 %v78, 7
  %v80 = vsub.s32 0, %v79
  %v81 = vrot.slane %v60, %v80
  %vm83 = vcmask 31744
  %v85 = vsel %vm83, %v61, 0
  %v88 = vsel %vm83, %v62, 0
  %v91 = vsel %vm83, %v63, 0
  %v94 = vsel %vm83, %v64, 0
  %v97 = vsel %vm83, %v65, 0
  %v100 = vsel %vm83, %v66, 0
  %v103 = vsel %vm83, %v67, 0
  %v106 = vsel %vm83, %v68, 0
  %v109 = vsel %vm83, %v69, 0
  %v112 = vsel %vm83, %v70, 0
  %v115 = vsel %vm83, %v71, 0
  %v118 = vsel %vm83, %v72, 0
  %v121 = vsel %vm83, %v73, 0
  %v124 = vsel %vm83, %v74, 0
  %v127 = vsel %vm83, %v75, 0
  %v130 = vsel %vm83, %v76, 0
  %vm132 = vcmask 1041408
  %v134 = vsel %vm132, %v59, 0
  %136 = vmatprep.subr.bf16.mxu0 0
  %137 = vmatpush1.bf16.msra.mxu0 %v134
  %138 = vmatprep.subr.bf16.mxu0 0
  %139 = vmatpush1.bf16.msra.mxu0 0
  %140 = vmatprep.subr.bf16.mxu0 0
  %141 = vmatpush1.bf16.msra.mxu0 0
  %142 = vmatprep.subr.bf16.mxu0 0
  %143 = vmatpush1.bf16.msra.mxu0 0
  %144 = vmatprep.subr.bf16.mxu0 0
  %145 = vmatpush1.bf16.msra.mxu0 0
  %146 = vmatprep.subr.bf16.mxu0 0
  %147 = vmatpush1.bf16.msra.mxu0 0
  %148 = vmatprep.subr.bf16.mxu0 0
  %149 = vmatpush1.bf16.msra.mxu0 0
  %150 = vmatprep.subr.bf16.mxu0 0
  %151 = vmatpush1.bf16.msra.mxu0 0
  %152 = vmatprep.subr.bf16.mxu0 0
  %153 = vmatpush1.bf16.msra.mxu0 0
  %154 = vmatprep.subr.bf16.mxu0 0
  %155 = vmatpush1.bf16.msra.mxu0 0
  %156 = vmatprep.subr.bf16.mxu0 0
  %157 = vmatpush1.bf16.msra.mxu0 0
  %158 = vmatprep.subr.bf16.mxu0 0
  %159 = vmatpush1.bf16.msra.mxu0 0
  %160 = vmatprep.subr.bf16.mxu0 0
  %161 = vmatpush1.bf16.msra.mxu0 0
  %162 = vmatprep.subr.bf16.mxu0 0
  %163 = vmatpush1.bf16.msra.mxu0 0
  %164 = vmatprep.subr.bf16.mxu0 0
  %165 = vmatpush1.bf16.msra.mxu0 0
  %166 = vmatprep.subr.bf16.mxu0 0
  %167 = vmatpush1.bf16.msra.mxu0 0
  %168 = vmatprep.mubr.bf16.mxu0 0
  %169 = vmatmul.mubr.bf16.gmra.mrb[0].mxu0 %v85
  %v170 = vpop.f32.mrb[0].mxu0
  %v171 = vadd.f32 %v81, %v170
  %v172 = vpop.f32.mrb[0].mxu0
  %v173 = vpop.f32.mrb[0].mxu0
  %v174 = vadd.f32 %v81, %v173
  %v175 = vpop.f32.mrb[0].mxu0
  %176 = vmatprep.mubr.bf16.mxu0 0
  %177 = vmatmul.mubr.bf16.gmra.mrb[0].mxu0 %v88
  %v178 = vpop.f32.mrb[0].mxu0
  %v179 = vadd.f32 %v81, %v178
  %v180 = vpop.f32.mrb[0].mxu0
  %v181 = vpop.f32.mrb[0].mxu0
  %v182 = vadd.f32 %v81, %v181
  %v183 = vpop.f32.mrb[0].mxu0
  %184 = vmatprep.mubr.bf16.mxu0 0
  %185 = vmatmul.mubr.bf16.gmra.mrb[0].mxu0 %v91
  %v186 = vpop.f32.mrb[0].mxu0
  %v187 = vadd.f32 %v81, %v186
  %v188 = vpop.f32.mrb[0].mxu0
  %v189 = vpop.f32.mrb[0].mxu0
  %v190 = vadd.f32 %v81, %v189
  %v191 = vpop.f32.mrb[0].mxu0
  %192 = vmatprep.mubr.bf16.mxu0 0
  %193 = vmatmul.mubr.bf16.gmra.mrb[0].mxu0 %v94
  %v194 = vpop.f32.mrb[0].mxu0
  %v195 = vadd.f32 %v81, %v194
  %v196 = vpop.f32.mrb[0].mxu0
  %v197 = vpop.f32.mrb[0].mxu0
  %v198 = vadd.f32 %v81, %v197
  %v199 = vpop.f32.mrb[0].mxu0
  %200 = vmatprep.mubr.bf16.mxu0 0
  %201 = vmatmul.mubr.bf16.gmra.mrb[0].mxu0 %v97
  %v202 = vpop.f32.mrb[0].mxu0
  %v203 = vadd.f32 %v81, %v202
  %v204 = vpop.f32.mrb[0].mxu0
  %v205 = vpop.f32.mrb[0].mxu0
  %v206 = vadd.f32 %v81, %v205
  %v207 = vpop.f32.mrb[0].mxu0
  %208 = vmatprep.mubr.bf16.mxu0 0
  %209 = vmatmul.mubr.bf16.gmra.mrb[0].mxu0 %v100
  %v210 = vpop.f32.mrb[0].mxu0
  %v211 = vadd.f32 %v81, %v210
  %v212 = vpop.f32.mrb[0].mxu0
  %v213 = vpop.f32.mrb[0].mxu0
  %v214 = vadd.f32 %v81, %v213
  %v215 = vpop.f32.mrb[0].mxu0
  %216 = vmatprep.mubr.bf16.mxu0 0
  %217 = vmatmul.mubr.bf16.gmra.mrb[0].mxu0 %v103
  %v218 = vpop.f32.mrb[0].mxu0
  %v219 = vadd.f32 %v81, %v218
  %v220 = vpop.f32.mrb[0].mxu0
  %v221 = vpop.f32.mrb[0].mxu0
  %v222 = vadd.f32 %v81, %v221
  %v223 = vpop.f32.mrb[0].mxu0
  %224 = vmatprep.mubr.bf16.mxu0 0
  %225 = vmatmul.mubr.bf16.gmra.mrb[0].mxu0 %v106
  %v226 = vpop.f32.mrb[0].mxu0
  %v227 = vadd.f32 %v81, %v226
  %v228 = vpop.f32.mrb[0].mxu0
  %v229 = vpop.f32.mrb[0].mxu0
  %v230 = vadd.f32 %v81, %v229
  %v231 = vpop.f32.mrb[0].mxu0
  %232 = vmatprep.mubr.bf16.mxu0 0
  %233 = vmatmul.mubr.bf16.gmra.mrb[0].mxu0 %v109
  %v234 = vpop.f32.mrb[0].mxu0
  %v235 = vadd.f32 %v81, %v234
  %v236 = vpop.f32.mrb[0].mxu0
  %v237 = vpop.f32.mrb[0].mxu0
  %v238 = vadd.f32 %v81, %v237
  %v239 = vpop.f32.mrb[0].mxu0
  %240 = vmatprep.mubr.bf16.mxu0 0
  %241 = vmatmul.mubr.bf16.gmra.mrb[0].mxu0 %v112
  %v242 = vpop.f32.mrb[0].mxu0
  %v243 = vadd.f32 %v81, %v242
  %v244 = vpop.f32.mrb[0].mxu0
  %v245 = vpop.f32.mrb[0].mxu0
  %v246 = vadd.f32 %v81, %v245
  %v247 = vpop.f32.mrb[0].mxu0
  %248 = vmatprep.mubr.bf16.mxu0 0
  %249 = vmatmul.mubr.bf16.gmra.mrb[0].mxu0 %v115
  %v250 = vpop.f32.mrb[0].mxu0
  %v251 = vadd.f32 %v81, %v250
  %v252 = vpop.f32.mrb[0].mxu0
  %v253 = vpop.f32.mrb[0].mxu0
  %v254 = vadd.f32 %v81, %v253
  %v255 = vpop.f32.mrb[0].mxu0
  %256 = vmatprep.mubr.bf16.mxu0 0
  %257 = vmatmul.mubr.bf16.gmra.mrb[0].mxu0 %v118
  %v258 = vpop.f32.mrb[0].mxu0
  %v259 = vadd.f32 %v81, %v258
  %v260 = vpop.f32.mrb[0].mxu0
  %v261 = vpop.f32.mrb[0].mxu0
  %v262 = vadd.f32 %v81, %v261
  %v263 = vpop.f32.mrb[0].mxu0
  %264 = vmatprep.mubr.bf16.mxu0 0
  %265 = vmatmul.mubr.bf16.gmra.mrb[0].mxu0 %v121
  %v266 = vpop.f32.mrb[0].mxu0
  %v267 = vadd.f32 %v81, %v266
  %v268 = vpop.f32.mrb[0].mxu0
  %v269 = vpop.f32.mrb[0].mxu0
  %v270 = vadd.f32 %v81, %v269
  %v271 = vpop.f32.mrb[0].mxu0
  %272 = vmatprep.mubr.bf16.mxu0 0
  %273 = vmatmul.mubr.bf16.gmra.mrb[0].mxu0 %v124
  %v274 = vpop.f32.mrb[0].mxu0
  %v275 = vadd.f32 %v81, %v274
  %v276 = vpop.f32.mrb[0].mxu0
  %v277 = vpop.f32.mrb[0].mxu0
  %v278 = vadd.f32 %v81, %v277
  %v279 = vpop.f32.mrb[0].mxu0
  %280 = vmatprep.mubr.bf16.mxu0 0
  %281 = vmatmul.mubr.bf16.gmra.mrb[0].mxu0 %v127
  %v282 = vpop.f32.mrb[0].mxu0
  %v283 = vadd.f32 %v81, %v282
  %v284 = vpop.f32.mrb[0].mxu0
  %v285 = vpop.f32.mrb[0].mxu0
  %v286 = vadd.f32 %v81, %v285
  %v287 = vpop.f32.mrb[0].mxu0
  %288 = vmatprep.mubr.bf16.mxu0 0
  %289 = vmatmul.mubr.bf16.gmra.mrb[0].mxu0 %v130
  %v290 = vpop.f32.mrb[0].mxu0
  %v291 = vadd.f32 %v81, %v290
  %v292 = vpop.f32.mrb[0].mxu0
  %v293 = vpop.f32.mrb[0].mxu0
  %v294 = vadd.f32 %v81, %v293
  %v295 = vpop.f32.mrb[0].mxu0
  %296 = vdwg.mxu0
  %vm297 = vcmp.gt.f32.partialorder %v171, 0.0
  %vm298 = vcmp.gt.f32.partialorder %v174, 0.0
  %vm299 = vcmp.gt.f32.partialorder %v179, 0.0
  %vm300 = vcmp.gt.f32.partialorder %v182, 0.0
  %vm301 = vcmp.gt.f32.partialorder %v187, 0.0
  %vm302 = vcmp.gt.f32.partialorder %v190, 0.0
  %vm303 = vcmp.gt.f32.partialorder %v195, 0.0
  %vm304 = vcmp.gt.f32.partialorder %v198, 0.0
  %vm305 = vcmp.gt.f32.partialorder %v203, 0.0
  %vm306 = vcmp.gt.f32.partialorder %v206, 0.0
  %vm307 = vcmp.gt.f32.partialorder %v211, 0.0
  %vm308 = vcmp.gt.f32.partialorder %v214, 0.0
  %vm309 = vcmp.gt.f32.partialorder %v219, 0.0
  %vm310 = vcmp.gt.f32.partialorder %v222, 0.0
  %vm311 = vcmp.gt.f32.partialorder %v227, 0.0
  %vm312 = vcmp.gt.f32.partialorder %v230, 0.0
  %vm313 = vcmp.gt.f32.partialorder %v235, 0.0
  %vm314 = vcmp.gt.f32.partialorder %v238, 0.0
  %vm315 = vcmp.gt.f32.partialorder %v243, 0.0
  %vm316 = vcmp.gt.f32.partialorder %v246, 0.0
  %vm317 = vcmp.gt.f32.partialorder %v251, 0.0
  %vm318 = vcmp.gt.f32.partialorder %v254, 0.0
  %vm319 = vcmp.gt.f32.partialorder %v259, 0.0
  %vm320 = vcmp.gt.f32.partialorder %v262, 0.0
  %vm321 = vcmp.gt.f32.partialorder %v267, 0.0
  %vm322 = vcmp.gt.f32.partialorder %v270, 0.0
  %vm323 = vcmp.gt.f32.partialorder %v275, 0.0
  %vm324 = vcmp.gt.f32.partialorder %v278, 0.0
  %vm325 = vcmp.gt.f32.partialorder %v283, 0.0
  %vm326 = vcmp.gt.f32.partialorder %v286, 0.0
  %vm327 = vcmp.gt.f32.partialorder %v291, 0.0
  %vm328 = vcmp.gt.f32.partialorder %v294, 0.0
  %v329 = vmin.f32 %v171, 0.0
  %v330 = vmin.f32 %v174, 0.0
  %v331 = vmin.f32 %v179, 0.0
  %v332 = vmin.f32 %v182, 0.0
  %v333 = vmin.f32 %v187, 0.0
  %v334 = vmin.f32 %v190, 0.0
  %v335 = vmin.f32 %v195, 0.0
  %v336 = vmin.f32 %v198, 0.0
  %v337 = vmin.f32 %v203, 0.0
  %v338 = vmin.f32 %v206, 0.0
  %v339 = vmin.f32 %v211, 0.0
  %v340 = vmin.f32 %v214, 0.0
  %v341 = vmin.f32 %v219, 0.0
  %v342 = vmin.f32 %v222, 0.0
  %v343 = vmin.f32 %v227, 0.0
  %v344 = vmin.f32 %v230, 0.0
  %v345 = vmin.f32 %v235, 0.0
  %v346 = vmin.f32 %v238, 0.0
  %v347 = vmin.f32 %v243, 0.0
  %v348 = vmin.f32 %v246, 0.0
  %v349 = vmin.f32 %v251, 0.0
  %v350 = vmin.f32 %v254, 0.0
  %v351 = vmin.f32 %v259, 0.0
  %v352 = vmin.f32 %v262, 0.0
  %v353 = vmin.f32 %v267, 0.0
  %v354 = vmin.f32 %v270, 0.0
  %v355 = vmin.f32 %v275, 0.0
  %v356 = vmin.f32 %v278, 0.0
  %v357 = vmin.f32 %v283, 0.0
  %v358 = vmin.f32 %v286, 0.0
  %v359 = vmin.f32 %v291, 0.0
  %v360 = vmin.f32 %v294, 0.0
  %v361 = vmul.f32 %v329, 1.442695
  %v362 = vpow.pop %v361
  %v363 = vmul.f32 %v330, 1.442695
  %v364 = vpow.pop %v363
  %v365 = vmul.f32 %v331, 1.442695
  %v366 = vpow.pop %v365
  %v367 = vmul.f32 %v332, 1.442695
  %v368 = vpow.pop %v367
  %v369 = vmul.f32 %v333, 1.442695
  %v370 = vpow.pop %v369
  %v371 = vmul.f32 %v334, 1.442695
  %v372 = vpow.pop %v371
  %v373 = vmul.f32 %v335, 1.442695
  %v374 = vpow.pop %v373
  %v375 = vmul.f32 %v336, 1.442695
  %v376 = vpow.pop %v375
  %v377 = vmul.f32 %v337, 1.442695
  %v378 = vpow.pop %v377
  %v379 = vmul.f32 %v338, 1.442695
  %v380 = vpow.pop %v379
  %v381 = vmul.f32 %v339, 1.442695
  %v382 = vpow.pop %v381
  %v383 = vmul.f32 %v340, 1.442695
  %v384 = vpow.pop %v383
  %v385 = vmul.f32 %v341, 1.442695
  %v386 = vpow.pop %v385
  %v387 = vmul.f32 %v342, 1.442695
  %v388 = vpow.pop %v387
  %v389 = vmul.f32 %v343, 1.442695
  %v390 = vpow.pop %v389
  %v391 = vmul.f32 %v344, 1.442695
  %v392 = vpow.pop %v391
  %v393 = vmul.f32 %v345, 1.442695
  %v394 = vpow.pop %v393
  %v395 = vmul.f32 %v346, 1.442695
  %v396 = vpow.pop %v395
  %v397 = vmul.f32 %v347, 1.442695
  %v398 = vpow.pop %v397
  %v399 = vmul.f32 %v348, 1.442695
  %v400 = vpow.pop %v399
  %v401 = vmul.f32 %v349, 1.442695
  %v402 = vpow.pop %v401
  %v403 = vmul.f32 %v350, 1.442695
  %v404 = vpow.pop %v403
  %v405 = vmul.f32 %v351, 1.442695
  %v406 = vpow.pop %v405
  %v407 = vmul.f32 %v352, 1.442695
  %v408 = vpow.pop %v407
  %v409 = vmul.f32 %v353, 1.442695
  %v410 = vpow.pop %v409
  %v411 = vmul.f32 %v354, 1.442695
  %v412 = vpow.pop %v411
  %v413 = vmul.f32 %v355, 1.442695
  %v414 = vpow.pop %v413
  %v415 = vmul.f32 %v356, 1.442695
  %v416 = vpow.pop %v415
  %v417 = vmul.f32 %v357, 1.442695
  %v418 = vpow.pop %v417
  %v419 = vmul.f32 %v358, 1.442695
  %v420 = vpow.pop %v419
  %v421 = vmul.f32 %v359, 1.442695
  %v422 = vpow.pop %v421
  %v423 = vmul.f32 %v360, 1.442695
  %v424 = vpow.pop %v423
  %v425 = vsub.f32 %v362, 1.0
  %v426 = vsub.f32 %v364, 1.0
  %v427 = vsub.f32 %v366, 1.0
  %v428 = vsub.f32 %v368, 1.0
  %v429 = vsub.f32 %v370, 1.0
  %v430 = vsub.f32 %v372, 1.0
  %v431 = vsub.f32 %v374, 1.0
  %v432 = vsub.f32 %v376, 1.0
  %v433 = vsub.f32 %v378, 1.0
  %v434 = vsub.f32 %v380, 1.0
  %v435 = vsub.f32 %v382, 1.0
  %v436 = vsub.f32 %v384, 1.0
  %v437 = vsub.f32 %v386, 1.0
  %v438 = vsub.f32 %v388, 1.0
  %v439 = vsub.f32 %v390, 1.0
  %v440 = vsub.f32 %v392, 1.0
  %v441 = vsub.f32 %v394, 1.0
  %v442 = vsub.f32 %v396, 1.0
  %v443 = vsub.f32 %v398, 1.0
  %v444 = vsub.f32 %v400, 1.0
  %v445 = vsub.f32 %v402, 1.0
  %v446 = vsub.f32 %v404, 1.0
  %v447 = vsub.f32 %v406, 1.0
  %v448 = vsub.f32 %v408, 1.0
  %v449 = vsub.f32 %v410, 1.0
  %v450 = vsub.f32 %v412, 1.0
  %v451 = vsub.f32 %v414, 1.0
  %v452 = vsub.f32 %v416, 1.0
  %v453 = vsub.f32 %v418, 1.0
  %v454 = vsub.f32 %v420, 1.0
  %v455 = vsub.f32 %v422, 1.0
  %v456 = vsub.f32 %v424, 1.0
  %v457 = vsel %vm297, %v171, %v425
  %v458 = vsel %vm298, %v174, %v426
  %v459 = vsel %vm299, %v179, %v427
  %v460 = vsel %vm300, %v182, %v428
  %v461 = vsel %vm301, %v187, %v429
  %v462 = vsel %vm302, %v190, %v430
  %v463 = vsel %vm303, %v195, %v431
  %v464 = vsel %vm304, %v198, %v432
  %v465 = vsel %vm305, %v203, %v433
  %v466 = vsel %vm306, %v206, %v434
  %v467 = vsel %vm307, %v211, %v435
  %v468 = vsel %vm308, %v214, %v436
  %v469 = vsel %vm309, %v219, %v437
  %v470 = vsel %vm310, %v222, %v438
  %v471 = vsel %vm311, %v227, %v439
  %v472 = vsel %vm312, %v230, %v440
  %v473 = vsel %vm313, %v235, %v441
  %v474 = vsel %vm314, %v238, %v442
  %v475 = vsel %vm315, %v243, %v443
  %v476 = vsel %vm316, %v246, %v444
  %v477 = vsel %vm317, %v251, %v445
  %v478 = vsel %vm318, %v254, %v446
  %v479 = vsel %vm319, %v259, %v447
  %v480 = vsel %vm320, %v262, %v448
  %v481 = vsel %vm321, %v267, %v449
  %v482 = vsel %vm322, %v270, %v450
  %v483 = vsel %vm323, %v275, %v451
  %v484 = vsel %vm324, %v278, %v452
  %v485 = vsel %vm325, %v283, %v453
  %v486 = vsel %vm326, %v286, %v454
  %v487 = vsel %vm327, %v291, %v455
  %v488 = vsel %vm328, %v294, %v456
  %v489 = vld [vmem:[%s3] sm:$0xf]
  %v490 = vld [vmem:[%s3 + $0x4] sm:$0xf]
  %v491 = vld [vmem:[%s3 + $0x8] sm:$0xf]
  %v492 = vld [vmem:[%s3 + $0xc] sm:$0xf]
  %v493 = vld [vmem:[%s3 + $0x10] sm:$0xf]
  %v494 = vld [vmem:[%s3 + $0x14] sm:$0xf]
  %v495 = vld [vmem:[%s3 + $0x18] sm:$0xf]
  %v496 = vld [vmem:[%s3 + $0x1c] sm:$0xf]
  %v497 = vld [vmem:[%s4] sm:$0x1]
  %v498 = vpack.c.bf16 %v458, %v457
  %v499 = vpack.c.bf16 %v460, %v459
  %v500 = vpack.c.bf16 %v462, %v461
  %v501 = vpack.c.bf16 %v464, %v463
  %v502 = vpack.c.bf16 %v466, %v465
  %v503 = vpack.c.bf16 %v468, %v467
  %v504 = vpack.c.bf16 %v470, %v469
  %v505 = vpack.c.bf16 %v472, %v471
  %v506 = vpack.c.bf16 %v474, %v473
  %v507 = vpack.c.bf16 %v476, %v475
  %v508 = vpack.c.bf16 %v478, %v477
  %v509 = vpack.c.bf16 %v480, %v479
  %v510 = vpack.c.bf16 %v482, %v481
  %v511 = vpack.c.bf16 %v484, %v483
  %v512 = vpack.c.bf16 %v486, %v485
  %v513 = vpack.c.bf16 %v488, %v487
  %v515 = vlaneseq
  %v516 = vshrl.u32 %v515, 7
  %v517 = vsub.s32 0, %v516
  %v518 = vrot.slane %v497, %v517
  %v528 = vunpack.c.l.b16 %v489
  %v529 = vunpack.c.l.b16 %v490
  %v530 = vunpack.c.l.b16 %v491
  %v531 = vunpack.c.l.b16 %v492
  %v532 = vunpack.c.l.b16 %v493
  %v533 = vunpack.c.l.b16 %v494
  %v534 = vunpack.c.l.b16 %v495
  %v535 = vunpack.c.l.b16 %v496
  %v536 = vpack.c.b16 %v529, %v528
  %v537 = vpack.c.b16 %v531, %v530
  %v538 = vpack.c.b16 %v533, %v532
  %v539 = vpack.c.b16 %v535, %v534
  %vm544 = vcmask 523264
  %v546 = vsel %vm544, %v498, 0
  %v549 = vsel %vm544, %v499, 0
  %v552 = vsel %vm544, %v500, 0
  %v555 = vsel %vm544, %v501, 0
  %v558 = vsel %vm544, %v502, 0
  %v561 = vsel %vm544, %v503, 0
  %v564 = vsel %vm544, %v504, 0
  %v567 = vsel %vm544, %v505, 0
  %v570 = vsel %vm544, %v506, 0
  %v573 = vsel %vm544, %v507, 0
  %v576 = vsel %vm544, %v508, 0
  %v579 = vsel %vm544, %v509, 0
  %v582 = vsel %vm544, %v510, 0
  %v585 = vsel %vm544, %v511, 0
  %v588 = vsel %vm544, %v512, 0
  %v591 = vsel %vm544, %v513, 0
  %593 = vmatprep.subr.bf16.mxu0 0
  %594 = vmatpush1.bf16.msra.mxu0 %v536
  %595 = vmatprep.subr.bf16.mxu0 0
  %596 = vmatpush1.bf16.msra.mxu0 %v537
  %597 = vmatprep.subr.bf16.mxu0 0
  %598 = vmatpush1.bf16.msra.mxu0 %v538
  %599 = vmatprep.subr.bf16.mxu0 0
  %600 = vmatpush1.bf16.msra.mxu0 %v539
  %601 = vmatprep.subr.bf16.mxu0 0
  %602 = vmatpush1.bf16.msra.mxu0 0
  %603 = vmatprep.subr.bf16.mxu0 0
  %604 = vmatpush1.bf16.msra.mxu0 0
  %605 = vmatprep.subr.bf16.mxu0 0
  %606 = vmatpush1.bf16.msra.mxu0 0
  %607 = vmatprep.subr.bf16.mxu0 0
  %608 = vmatpush1.bf16.msra.mxu0 0
  %609 = vmatprep.subr.bf16.mxu0 0
  %610 = vmatpush1.bf16.msra.mxu0 0
  %611 = vmatprep.subr.bf16.mxu0 0
  %612 = vmatpush1.bf16.msra.mxu0 0
  %613 = vmatprep.subr.bf16.mxu0 0
  %614 = vmatpush1.bf16.msra.mxu0 0
  %615 = vmatprep.subr.bf16.mxu0 0
  %616 = vmatpush1.bf16.msra.mxu0 0
  %617 = vmatprep.subr.bf16.mxu0 0
  %618 = vmatpush1.bf16.msra.mxu0 0
  %619 = vmatprep.subr.bf16.mxu0 0
  %620 = vmatpush1.bf16.msra.mxu0 0
  %621 = vmatprep.subr.bf16.mxu0 0
  %622 = vmatpush1.bf16.msra.mxu0 0
  %623 = vmatprep.subr.bf16.mxu0 0
  %624 = vmatpush1.bf16.msra.mxu0 0
  %625 = vmatprep.mubr.bf16.mxu0 0
  %626 = vmatmul.mubr.bf16.gmra.mrb[0].mxu0 %v546
  %v627 = vpop.f32.mrb[0].mxu0
  %v628 = vadd.f32 %v518, %v627
  %v629 = vpop.f32.mrb[0].mxu0
  %v630 = vpop.f32.mrb[0].mxu0
  %v631 = vadd.f32 %v518, %v630
  %v632 = vpop.f32.mrb[0].mxu0
  %633 = vmatprep.mubr.bf16.mxu0 0
  %634 = vmatmul.mubr.bf16.gmra.mrb[0].mxu0 %v549
  %v635 = vpop.f32.mrb[0].mxu0
  %v636 = vadd.f32 %v518, %v635
  %v637 = vpop.f32.mrb[0].mxu0
  %v638 = vpop.f32.mrb[0].mxu0
  %v639 = vadd.f32 %v518, %v638
  %v640 = vpop.f32.mrb[0].mxu0
  %641 = vmatprep.mubr.bf16.mxu0 0
  %642 = vmatmul.mubr.bf16.gmra.mrb[0].mxu0 %v552
  %v643 = vpop.f32.mrb[0].mxu0
  %v644 = vadd.f32 %v518, %v643
  %v645 = vpop.f32.mrb[0].mxu0
  %v646 = vpop.f32.mrb[0].mxu0
  %v647 = vadd.f32 %v518, %v646
  %v648 = vpop.f32.mrb[0].mxu0
  %649 = vmatprep.mubr.bf16.mxu0 0
  %650 = vmatmul.mubr.bf16.gmra.mrb[0].mxu0 %v555
  %v651 = vpop.f32.mrb[0].mxu0
  %v652 = vadd.f32 %v518, %v651
  %v653 = vpop.f32.mrb[0].mxu0
  %v654 = vpop.f32.mrb[0].mxu0
  %v655 = vadd.f32 %v518, %v654
  %v656 = vpop.f32.mrb[0].mxu0
  %657 = vmatprep.mubr.bf16.mxu0 0
  %658 = vmatmul.mubr.bf16.gmra.mrb[0].mxu0 %v558
  %v659 = vpop.f32.mrb[0].mxu0
  %v660 = vadd.f32 %v518, %v659
  %v661 = vpop.f32.mrb[0].mxu0
  %v662 = vpop.f32.mrb[0].mxu0
  %v663 = vadd.f32 %v518, %v662
  %v664 = vpop.f32.mrb[0].mxu0
  %665 = vmatprep.mubr.bf16.mxu0 0
  %666 = vmatmul.mubr.bf16.gmra.mrb[0].mxu0 %v561
  %v667 = vpop.f32.mrb[0].mxu0
  %v668 = vadd.f32 %v518, %v667
  %v669 = vpop.f32.mrb[0].mxu0
  %v670 = vpop.f32.mrb[0].mxu0
  %v671 = vadd.f32 %v518, %v670
  %v672 = vpop.f32.mrb[0].mxu0
  %673 = vmatprep.mubr.bf16.mxu0 0
  %674 = vmatmul.mubr.bf16.gmra.mrb[0].mxu0 %v564
  %v675 = vpop.f32.mrb[0].mxu0
  %v676 = vadd.f32 %v518, %v675
  %v677 = vpop.f32.mrb[0].mxu0
  %v678 = vpop.f32.mrb[0].mxu0
  %v679 = vadd.f32 %v518, %v678
  %v680 = vpop.f32.mrb[0].mxu0
  %681 = vmatprep.mubr.bf16.mxu0 0
  %682 = vmatmul.mubr.bf16.gmra.mrb[0].mxu0 %v567
  %v683 = vpop.f32.mrb[0].mxu0
  %v684 = vadd.f32 %v518, %v683
  %v685 = vpop.f32.mrb[0].mxu0
  %v686 = vpop.f32.mrb[0].mxu0
  %v687 = vadd.f32 %v518, %v686
  %v688 = vpop.f32.mrb[0].mxu0
  %689 = vmatprep.mubr.bf16.mxu0 0
  %690 = vmatmul.mubr.bf16.gmra.mrb[0].mxu0 %v570
  %v691 = vpop.f32.mrb[0].mxu0
  %v692 = vadd.f32 %v518, %v691
  %v693 = vpop.f32.mrb[0].mxu0
  %v694 = vpop.f32.mrb[0].mxu0
  %v695 = vadd.f32 %v518, %v694
  %v696 = vpop.f32.mrb[0].mxu0
  %697 = vmatprep.mubr.bf16.mxu0 0
  %698 = vmatmul.mubr.bf16.gmra.mrb[0].mxu0 %v573
  %v699 = vpop.f32.mrb[0].mxu0
  %v700 = vadd.f32 %v518, %v699
  %v701 = vpop.f32.mrb[0].mxu0
  %v702 = vpop.f32.mrb[0].mxu0
  %v703 = vadd.f32 %v518, %v702
  %v704 = vpop.f32.mrb[0].mxu0
  %705 = vmatprep.mubr.bf16.mxu0 0
  %706 = vmatmul.mubr.bf16.gmra.mrb[0].mxu0 %v576
  %v707 = vpop.f32.mrb[0].mxu0
  %v708 = vadd.f32 %v518, %v707
  %v709 = vpop.f32.mrb[0].mxu0
  %v710 = vpop.f32.mrb[0].mxu0
  %v711 = vadd.f32 %v518, %v710
  %v712 = vpop.f32.mrb[0].mxu0
  %713 = vmatprep.mubr.bf16.mxu0 0
  %714 = vmatmul.mubr.bf16.gmra.mrb[0].mxu0 %v579
  %v715 = vpop.f32.mrb[0].mxu0
  %v716 = vadd.f32 %v518, %v715
  %v717 = vpop.f32.mrb[0].mxu0
  %v718 = vpop.f32.mrb[0].mxu0
  %v719 = vadd.f32 %v518, %v718
  %v720 = vpop.f32.mrb[0].mxu0
  %721 = vmatprep.mubr.bf16.mxu0 0
  %722 = vmatmul.mubr.bf16.gmra.mrb[0].mxu0 %v582
  %v723 = vpop.f32.mrb[0].mxu0
  %v724 = vadd.f32 %v518, %v723
  %v725 = vpop.f32.mrb[0].mxu0
  %v726 = vpop.f32.mrb[0].mxu0
  %v727 = vadd.f32 %v518, %v726
  %v728 = vpop.f32.mrb[0].mxu0
  %729 = vmatprep.mubr.bf16.mxu0 0
  %730 = vmatmul.mubr.bf16.gmra.mrb[0].mxu0 %v585
  %v731 = vpop.f32.mrb[0].mxu0
  %v732 = vadd.f32 %v518, %v731
  %v733 = vpop.f32.mrb[0].mxu0
  %v734 = vpop.f32.mrb[0].mxu0
  %v735 = vadd.f32 %v518, %v734
  %v736 = vpop.f32.mrb[0].mxu0
  %737 = vmatprep.mubr.bf16.mxu0 0
  %738 = vmatmul.mubr.bf16.gmra.mrb[0].mxu0 %v588
  %v739 = vpop.f32.mrb[0].mxu0
  %v740 = vadd.f32 %v518, %v739
  %v741 = vpop.f32.mrb[0].mxu0
  %v742 = vpop.f32.mrb[0].mxu0
  %v743 = vadd.f32 %v518, %v742
  %v744 = vpop.f32.mrb[0].mxu0
  %745 = vmatprep.mubr.bf16.mxu0 0
  %746 = vmatmul.mubr.bf16.gmra.mrb[0].mxu0 %v591
  %v747 = vpop.f32.mrb[0].mxu0
  %v748 = vadd.f32 %v518, %v747
  %v749 = vpop.f32.mrb[0].mxu0
  %v750 = vpop.f32.mrb[0].mxu0
  %v751 = vadd.f32 %v518, %v750
  %v752 = vpop.f32.mrb[0].mxu0
  %753 = vdwg.mxu0
  %vm754 = vcmp.gt.f32.partialorder %v628, 0.0
  %vm755 = vcmp.gt.f32.partialorder %v631, 0.0
  %vm756 = vcmp.gt.f32.partialorder %v636, 0.0
  %vm757 = vcmp.gt.f32.partialorder %v639, 0.0
  %vm758 = vcmp.gt.f32.partialorder %v644, 0.0
  %vm759 = vcmp.gt.f32.partialorder %v647, 0.0
  %vm760 = vcmp.gt.f32.partialorder %v652, 0.0
  %vm761 = vcmp.gt.f32.partialorder %v655, 0.0
  %vm762 = vcmp.gt.f32.partialorder %v660, 0.0
  %vm763 = vcmp.gt.f32.partialorder %v663, 0.0
  %vm764 = vcmp.gt.f32.partialorder %v668, 0.0
  %vm765 = vcmp.gt.f32.partialorder %v671, 0.0
  %vm766 = vcmp.gt.f32.partialorder %v676, 0.0
  %vm767 = vcmp.gt.f32.partialorder %v679, 0.0
  %vm768 = vcmp.gt.f32.partialorder %v684, 0.0
  %vm769 = vcmp.gt.f32.partialorder %v687, 0.0
  %vm770 = vcmp.gt.f32.partialorder %v692, 0.0
  %vm771 = vcmp.gt.f32.partialorder %v695, 0.0
  %vm772 = vcmp.gt.f32.partialorder %v700, 0.0
  %vm773 = vcmp.gt.f32.partialorder %v703, 0.0
  %vm774 = vcmp.gt.f32.partialorder %v708, 0.0
  %vm775 = vcmp.gt.f32.partialorder %v711, 0.0
  %vm776 = vcmp.gt.f32.partialorder %v716, 0.0
  %vm777 = vcmp.gt.f32.partialorder %v719, 0.0
  %vm778 = vcmp.gt.f32.partialorder %v724, 0.0
  %vm779 = vcmp.gt.f32.partialorder %v727, 0.0
  %vm780 = vcmp.gt.f32.partialorder %v732, 0.0
  %vm781 = vcmp.gt.f32.partialorder %v735, 0.0
  %vm782 = vcmp.gt.f32.partialorder %v740, 0.0
  %vm783 = vcmp.gt.f32.partialorder %v743, 0.0
  %vm784 = vcmp.gt.f32.partialorder %v748, 0.0
  %vm785 = vcmp.gt.f32.partialorder %v751, 0.0
  %v786 = vmin.f32 %v628, 0.0
  %v787 = vmin.f32 %v631, 0.0
  %v788 = vmin.f32 %v636, 0.0
  %v789 = vmin.f32 %v639, 0.0
  %v790 = vmin.f32 %v644, 0.0
  %v791 = vmin.f32 %v647, 0.0
  %v792 = vmin.f32 %v652, 0.0
  %v793 = vmin.f32 %v655, 0.0
  %v794 = vmin.f32 %v660, 0.0
  %v795 = vmin.f32 %v663, 0.0
  %v796 = vmin.f32 %v668, 0.0
  %v797 = vmin.f32 %v671, 0.0
  %v798 = vmin.f32 %v676, 0.0
  %v799 = vmin.f32 %v679, 0.0
  %v800 = vmin.f32 %v684, 0.0
  %v801 = vmin.f32 %v687, 0.0
  %v802 = vmin.f32 %v692, 0.0
  %v803 = vmin.f32 %v695, 0.0
  %v804 = vmin.f32 %v700, 0.0
  %v805 = vmin.f32 %v703, 0.0
  %v806 = vmin.f32 %v708, 0.0
  %v807 = vmin.f32 %v711, 0.0
  %v808 = vmin.f32 %v716, 0.0
  %v809 = vmin.f32 %v719, 0.0
  %v810 = vmin.f32 %v724, 0.0
  %v811 = vmin.f32 %v727, 0.0
  %v812 = vmin.f32 %v732, 0.0
  %v813 = vmin.f32 %v735, 0.0
  %v814 = vmin.f32 %v740, 0.0
  %v815 = vmin.f32 %v743, 0.0
  %v816 = vmin.f32 %v748, 0.0
  %v817 = vmin.f32 %v751, 0.0
  %v818 = vmul.f32 %v786, 1.442695
  %v819 = vpow.pop %v818
  %v820 = vmul.f32 %v787, 1.442695
  %v821 = vpow.pop %v820
  %v822 = vmul.f32 %v788, 1.442695
  %v823 = vpow.pop %v822
  %v824 = vmul.f32 %v789, 1.442695
  %v825 = vpow.pop %v824
  %v826 = vmul.f32 %v790, 1.442695
  %v827 = vpow.pop %v826
  %v828 = vmul.f32 %v791, 1.442695
  %v829 = vpow.pop %v828
  %v830 = vmul.f32 %v792, 1.442695
  %v831 = vpow.pop %v830
  %v832 = vmul.f32 %v793, 1.442695
  %v833 = vpow.pop %v832
  %v834 = vmul.f32 %v794, 1.442695
  %v835 = vpow.pop %v834
  %v836 = vmul.f32 %v795, 1.442695
  %v837 = vpow.pop %v836
  %v838 = vmul.f32 %v796, 1.442695
  %v839 = vpow.pop %v838
  %v840 = vmul.f32 %v797, 1.442695
  %v841 = vpow.pop %v840
  %v842 = vmul.f32 %v798, 1.442695
  %v843 = vpow.pop %v842
  %v844 = vmul.f32 %v799, 1.442695
  %v845 = vpow.pop %v844
  %v846 = vmul.f32 %v800, 1.442695
  %v847 = vpow.pop %v846
  %v848 = vmul.f32 %v801, 1.442695
  %v849 = vpow.pop %v848
  %v850 = vmul.f32 %v802, 1.442695
  %v851 = vpow.pop %v850
  %v852 = vmul.f32 %v803, 1.442695
  %v853 = vpow.pop %v852
  %v854 = vmul.f32 %v804, 1.442695
  %v855 = vpow.pop %v854
  %v856 = vmul.f32 %v805, 1.442695
  %v857 = vpow.pop %v856
  %v858 = vmul.f32 %v806, 1.442695
  %v859 = vpow.pop %v858
  %v860 = vmul.f32 %v807, 1.442695
  %v861 = vpow.pop %v860
  %v862 = vmul.f32 %v808, 1.442695
  %v863 = vpow.pop %v862
  %v864 = vmul.f32 %v809, 1.442695
  %v865 = vpow.pop %v864
  %v866 = vmul.f32 %v810, 1.442695
  %v867 = vpow.pop %v866
  %v868 = vmul.f32 %v811, 1.442695
  %v869 = vpow.pop %v868
  %v870 = vmul.f32 %v812, 1.442695
  %v871 = vpow.pop %v870
  %v872 = vmul.f32 %v813, 1.442695
  %v873 = vpow.pop %v872
  %v874 = vmul.f32 %v814, 1.442695
  %v875 = vpow.pop %v874
  %v876 = vmul.f32 %v815, 1.442695
  %v877 = vpow.pop %v876
  %v878 = vmul.f32 %v816, 1.442695
  %v879 = vpow.pop %v878
  %v880 = vmul.f32 %v817, 1.442695
  %v881 = vpow.pop %v880
  %v882 = vsub.f32 %v819, 1.0
  %v883 = vsub.f32 %v821, 1.0
  %v884 = vsub.f32 %v823, 1.0
  %v885 = vsub.f32 %v825, 1.0
  %v886 = vsub.f32 %v827, 1.0
  %v887 = vsub.f32 %v829, 1.0
  %v888 = vsub.f32 %v831, 1.0
  %v889 = vsub.f32 %v833, 1.0
  %v890 = vsub.f32 %v835, 1.0
  %v891 = vsub.f32 %v837, 1.0
  %v892 = vsub.f32 %v839, 1.0
  %v893 = vsub.f32 %v841, 1.0
  %v894 = vsub.f32 %v843, 1.0
  %v895 = vsub.f32 %v845, 1.0
  %v896 = vsub.f32 %v847, 1.0
  %v897 = vsub.f32 %v849, 1.0
  %v898 = vsub.f32 %v851, 1.0
  %v899 = vsub.f32 %v853, 1.0
  %v900 = vsub.f32 %v855, 1.0
  %v901 = vsub.f32 %v857, 1.0
  %v902 = vsub.f32 %v859, 1.0
  %v903 = vsub.f32 %v861, 1.0
  %v904 = vsub.f32 %v863, 1.0
  %v905 = vsub.f32 %v865, 1.0
  %v906 = vsub.f32 %v867, 1.0
  %v907 = vsub.f32 %v869, 1.0
  %v908 = vsub.f32 %v871, 1.0
  %v909 = vsub.f32 %v873, 1.0
  %v910 = vsub.f32 %v875, 1.0
  %v911 = vsub.f32 %v877, 1.0
  %v912 = vsub.f32 %v879, 1.0
  %v913 = vsub.f32 %v881, 1.0
  %v914 = vsel %vm754, %v628, %v882
  %v915 = vsel %vm755, %v631, %v883
  %v916 = vsel %vm756, %v636, %v884
  %v917 = vsel %vm757, %v639, %v885
  %v918 = vsel %vm758, %v644, %v886
  %v919 = vsel %vm759, %v647, %v887
  %v920 = vsel %vm760, %v652, %v888
  %v921 = vsel %vm761, %v655, %v889
  %v922 = vsel %vm762, %v660, %v890
  %v923 = vsel %vm763, %v663, %v891
  %v924 = vsel %vm764, %v668, %v892
  %v925 = vsel %vm765, %v671, %v893
  %v926 = vsel %vm766, %v676, %v894
  %v927 = vsel %vm767, %v679, %v895
  %v928 = vsel %vm768, %v684, %v896
  %v929 = vsel %vm769, %v687, %v897
  %v930 = vsel %vm770, %v692, %v898
  %v931 = vsel %vm771, %v695, %v899
  %v932 = vsel %vm772, %v700, %v900
  %v933 = vsel %vm773, %v703, %v901
  %v934 = vsel %vm774, %v708, %v902
  %v935 = vsel %vm775, %v711, %v903
  %v936 = vsel %vm776, %v716, %v904
  %v937 = vsel %vm777, %v719, %v905
  %v938 = vsel %vm778, %v724, %v906
  %v939 = vsel %vm779, %v727, %v907
  %v940 = vsel %vm780, %v732, %v908
  %v941 = vsel %vm781, %v735, %v909
  %v942 = vsel %vm782, %v740, %v910
  %v943 = vsel %vm783, %v743, %v911
  %v944 = vsel %vm784, %v748, %v912
  %v945 = vsel %vm785, %v751, %v913
  %v946 = vld [vmem:[%s5] sm:$0xf]
  %v947 = vld [vmem:[%s5 + $0x4] sm:$0xf]
  %v948 = vld [vmem:[%s5 + $0x8] sm:$0xf]
  %v949 = vld [vmem:[%s5 + $0xc] sm:$0xf]
  %v950 = vld [vmem:[%s5 + $0x10] sm:$0xf]
  %v951 = vld [vmem:[%s5 + $0x14] sm:$0xf]
  %v952 = vld [vmem:[%s5 + $0x18] sm:$0xf]
  %v953 = vld [vmem:[%s5 + $0x1c] sm:$0xf]
  %v954 = vld [vmem:[%s6] sm:$0x1]
  %v955 = vpack.c.bf16 %v915, %v914
  %v956 = vpack.c.bf16 %v917, %v916
  %v957 = vpack.c.bf16 %v919, %v918
  %v958 = vpack.c.bf16 %v921, %v920
  %v959 = vpack.c.bf16 %v923, %v922
  %v960 = vpack.c.bf16 %v925, %v924
  %v961 = vpack.c.bf16 %v927, %v926
  %v962 = vpack.c.bf16 %v929, %v928
  %v963 = vpack.c.bf16 %v931, %v930
  %v964 = vpack.c.bf16 %v933, %v932
  %v965 = vpack.c.bf16 %v935, %v934
  %v966 = vpack.c.bf16 %v937, %v936
  %v967 = vpack.c.bf16 %v939, %v938
  %v968 = vpack.c.bf16 %v941, %v940
  %v969 = vpack.c.bf16 %v943, %v942
  %v970 = vpack.c.bf16 %v945, %v944
  %v972 = vlaneseq
  %v973 = vshrl.u32 %v972, 7
  %v974 = vsub.s32 0, %v973
  %v975 = vrot.slane %v954, %v974
  %v985 = vunpack.c.l.b16 %v946
  %v986 = vunpack.c.l.b16 %v947
  %v987 = vunpack.c.l.b16 %v948
  %v988 = vunpack.c.l.b16 %v949
  %v989 = vunpack.c.l.b16 %v950
  %v990 = vunpack.c.l.b16 %v951
  %v991 = vunpack.c.l.b16 %v952
  %v992 = vunpack.c.l.b16 %v953
  %v993 = vpack.c.b16 %v986, %v985
  %v994 = vpack.c.b16 %v988, %v987
  %v995 = vpack.c.b16 %v990, %v989
  %v996 = vpack.c.b16 %v992, %v991
  %v1002 = vsel %vm544, %v955, 0
  %v1005 = vsel %vm544, %v956, 0
  %v1008 = vsel %vm544, %v957, 0
  %v1011 = vsel %vm544, %v958, 0
  %v1014 = vsel %vm544, %v959, 0
  %v1017 = vsel %vm544, %v960, 0
  %v1020 = vsel %vm544, %v961, 0
  %v1023 = vsel %vm544, %v962, 0
  %v1026 = vsel %vm544, %v963, 0
  %v1029 = vsel %vm544, %v964, 0
  %v1032 = vsel %vm544, %v965, 0
  %v1035 = vsel %vm544, %v966, 0
  %v1038 = vsel %vm544, %v967, 0
  %v1041 = vsel %vm544, %v968, 0
  %v1044 = vsel %vm544, %v969, 0
  %v1047 = vsel %vm544, %v970, 0
  %1049 = vmatprep.subr.bf16.mxu0 0
  %1050 = vmatpush1.bf16.msra.mxu0 %v993
  %1051 = vmatprep.subr.bf16.mxu0 0
  %1052 = vmatpush1.bf16.msra.mxu0 %v994
  %1053 = vmatprep.subr.bf16.mxu0 0
  %1054 = vmatpush1.bf16.msra.mxu0 %v995
  %1055 = vmatprep.subr.bf16.mxu0 0
  %1056 = vmatpush1.bf16.msra.mxu0 %v996
  %1057 = vmatprep.subr.bf16.mxu0 0
  %1058 = vmatpush1.bf16.msra.mxu0 0
  %1059 = vmatprep.subr.bf16.mxu0 0
  %1060 = vmatpush1.bf16.msra.mxu0 0
  %1061 = vmatprep.subr.bf16.mxu0 0
  %1062 = vmatpush1.bf16.msra.mxu0 0
  %1063 = vmatprep.subr.bf16.mxu0 0
  %1064 = vmatpush1.bf16.msra.mxu0 0
  %1065 = vmatprep.subr.bf16.mxu0 0
  %1066 = vmatpush1.bf16.msra.mxu0 0
  %1067 = vmatprep.subr.bf16.mxu0 0
  %1068 = vmatpush1.bf16.msra.mxu0 0
  %1069 = vmatprep.subr.bf16.mxu0 0
  %1070 = vmatpush1.bf16.msra.mxu0 0
  %1071 = vmatprep.subr.bf16.mxu0 0
  %1072 = vmatpush1.bf16.msra.mxu0 0
  %1073 = vmatprep.subr.bf16.mxu0 0
  %1074 = vmatpush1.bf16.msra.mxu0 0
  %1075 = vmatprep.subr.bf16.mxu0 0
  %1076 = vmatpush1.bf16.msra.mxu0 0
  %1077 = vmatprep.subr.bf16.mxu0 0
  %1078 = vmatpush1.bf16.msra.mxu0 0
  %1079 = vmatprep.subr.bf16.mxu0 0
  %1080 = vmatpush1.bf16.msra.mxu0 0
  %1081 = vmatprep.mubr.bf16.mxu0 0
  %1082 = vmatmul.mubr.bf16.gmra.mrb[0].mxu0 %v1002
  %v1083 = vpop.f32.mrb[0].mxu0
  %v1084 = vadd.f32 %v975, %v1083
  %v1085 = vpop.f32.mrb[0].mxu0
  %v1086 = vpop.f32.mrb[0].mxu0
  %v1087 = vadd.f32 %v975, %v1086
  %v1088 = vpop.f32.mrb[0].mxu0
  %1089 = vmatprep.mubr.bf16.mxu0 0
  %1090 = vmatmul.mubr.bf16.gmra.mrb[0].mxu0 %v1005
  %v1091 = vpop.f32.mrb[0].mxu0
  %v1092 = vadd.f32 %v975, %v1091
  %v1093 = vpop.f32.mrb[0].mxu0
  %v1094 = vpop.f32.mrb[0].mxu0
  %v1095 = vadd.f32 %v975, %v1094
  %v1096 = vpop.f32.mrb[0].mxu0
  %1097 = vmatprep.mubr.bf16.mxu0 0
  %1098 = vmatmul.mubr.bf16.gmra.mrb[0].mxu0 %v1008
  %v1099 = vpop.f32.mrb[0].mxu0
  %v1100 = vadd.f32 %v975, %v1099
  %v1101 = vpop.f32.mrb[0].mxu0
  %v1102 = vpop.f32.mrb[0].mxu0
  %v1103 = vadd.f32 %v975, %v1102
  %v1104 = vpop.f32.mrb[0].mxu0
  %1105 = vmatprep.mubr.bf16.mxu0 0
  %1106 = vmatmul.mubr.bf16.gmra.mrb[0].mxu0 %v1011
  %v1107 = vpop.f32.mrb[0].mxu0
  %v1108 = vadd.f32 %v975, %v1107
  %v1109 = vpop.f32.mrb[0].mxu0
  %v1110 = vpop.f32.mrb[0].mxu0
  %v1111 = vadd.f32 %v975, %v1110
  %v1112 = vpop.f32.mrb[0].mxu0
  %1113 = vmatprep.mubr.bf16.mxu0 0
  %1114 = vmatmul.mubr.bf16.gmra.mrb[0].mxu0 %v1014
  %v1115 = vpop.f32.mrb[0].mxu0
  %v1116 = vadd.f32 %v975, %v1115
  %v1117 = vpop.f32.mrb[0].mxu0
  %v1118 = vpop.f32.mrb[0].mxu0
  %v1119 = vadd.f32 %v975, %v1118
  %v1120 = vpop.f32.mrb[0].mxu0
  %1121 = vmatprep.mubr.bf16.mxu0 0
  %1122 = vmatmul.mubr.bf16.gmra.mrb[0].mxu0 %v1017
  %v1123 = vpop.f32.mrb[0].mxu0
  %v1124 = vadd.f32 %v975, %v1123
  %v1125 = vpop.f32.mrb[0].mxu0
  %v1126 = vpop.f32.mrb[0].mxu0
  %v1127 = vadd.f32 %v975, %v1126
  %v1128 = vpop.f32.mrb[0].mxu0
  %1129 = vmatprep.mubr.bf16.mxu0 0
  %1130 = vmatmul.mubr.bf16.gmra.mrb[0].mxu0 %v1020
  %v1131 = vpop.f32.mrb[0].mxu0
  %v1132 = vadd.f32 %v975, %v1131
  %v1133 = vpop.f32.mrb[0].mxu0
  %v1134 = vpop.f32.mrb[0].mxu0
  %v1135 = vadd.f32 %v975, %v1134
  %v1136 = vpop.f32.mrb[0].mxu0
  %1137 = vmatprep.mubr.bf16.mxu0 0
  %1138 = vmatmul.mubr.bf16.gmra.mrb[0].mxu0 %v1023
  %v1139 = vpop.f32.mrb[0].mxu0
  %v1140 = vadd.f32 %v975, %v1139
  %v1141 = vpop.f32.mrb[0].mxu0
  %v1142 = vpop.f32.mrb[0].mxu0
  %v1143 = vadd.f32 %v975, %v1142
  %v1144 = vpop.f32.mrb[0].mxu0
  %1145 = vmatprep.mubr.bf16.mxu0 0
  %1146 = vmatmul.mubr.bf16.gmra.mrb[0].mxu0 %v1026
  %v1147 = vpop.f32.mrb[0].mxu0
  %v1148 = vadd.f32 %v975, %v1147
  %v1149 = vpop.f32.mrb[0].mxu0
  %v1150 = vpop.f32.mrb[0].mxu0
  %v1151 = vadd.f32 %v975, %v1150
  %v1152 = vpop.f32.mrb[0].mxu0
  %1153 = vmatprep.mubr.bf16.mxu0 0
  %1154 = vmatmul.mubr.bf16.gmra.mrb[0].mxu0 %v1029
  %v1155 = vpop.f32.mrb[0].mxu0
  %v1156 = vadd.f32 %v975, %v1155
  %v1157 = vpop.f32.mrb[0].mxu0
  %v1158 = vpop.f32.mrb[0].mxu0
  %v1159 = vadd.f32 %v975, %v1158
  %v1160 = vpop.f32.mrb[0].mxu0
  %1161 = vmatprep.mubr.bf16.mxu0 0
  %1162 = vmatmul.mubr.bf16.gmra.mrb[0].mxu0 %v1032
  %v1163 = vpop.f32.mrb[0].mxu0
  %v1164 = vadd.f32 %v975, %v1163
  %v1165 = vpop.f32.mrb[0].mxu0
  %v1166 = vpop.f32.mrb[0].mxu0
  %v1167 = vadd.f32 %v975, %v1166
  %v1168 = vpop.f32.mrb[0].mxu0
  %1169 = vmatprep.mubr.bf16.mxu0 0
  %1170 = vmatmul.mubr.bf16.gmra.mrb[0].mxu0 %v1035
  %v1171 = vpop.f32.mrb[0].mxu0
  %v1172 = vadd.f32 %v975, %v1171
  %v1173 = vpop.f32.mrb[0].mxu0
  %v1174 = vpop.f32.mrb[0].mxu0
  %v1175 = vadd.f32 %v975, %v1174
  %v1176 = vpop.f32.mrb[0].mxu0
  %1177 = vmatprep.mubr.bf16.mxu0 0
  %1178 = vmatmul.mubr.bf16.gmra.mrb[0].mxu0 %v1038
  %v1179 = vpop.f32.mrb[0].mxu0
  %v1180 = vadd.f32 %v975, %v1179
  %v1181 = vpop.f32.mrb[0].mxu0
  %v1182 = vpop.f32.mrb[0].mxu0
  %v1183 = vadd.f32 %v975, %v1182
  %v1184 = vpop.f32.mrb[0].mxu0
  %1185 = vmatprep.mubr.bf16.mxu0 0
  %1186 = vmatmul.mubr.bf16.gmra.mrb[0].mxu0 %v1041
  %v1187 = vpop.f32.mrb[0].mxu0
  %v1188 = vadd.f32 %v975, %v1187
  %v1189 = vpop.f32.mrb[0].mxu0
  %v1190 = vpop.f32.mrb[0].mxu0
  %v1191 = vadd.f32 %v975, %v1190
  %v1192 = vpop.f32.mrb[0].mxu0
  %1193 = vmatprep.mubr.bf16.mxu0 0
  %1194 = vmatmul.mubr.bf16.gmra.mrb[0].mxu0 %v1044
  %v1195 = vpop.f32.mrb[0].mxu0
  %v1196 = vadd.f32 %v975, %v1195
  %v1197 = vpop.f32.mrb[0].mxu0
  %v1198 = vpop.f32.mrb[0].mxu0
  %v1199 = vadd.f32 %v975, %v1198
  %v1200 = vpop.f32.mrb[0].mxu0
  %1201 = vmatprep.mubr.bf16.mxu0 0
  %1202 = vmatmul.mubr.bf16.gmra.mrb[0].mxu0 %v1047
  %v1203 = vpop.f32.mrb[0].mxu0
  %v1204 = vadd.f32 %v975, %v1203
  %v1205 = vpop.f32.mrb[0].mxu0
  %v1206 = vpop.f32.mrb[0].mxu0
  %v1207 = vadd.f32 %v975, %v1206
  %v1208 = vpop.f32.mrb[0].mxu0
  %1209 = vdwg.mxu0
  %1210 = vst.msk [vmem:[%s7] sm:$0xff] %vm83, %v1084
  %1211 = vst.msk [vmem:[%s7 + $0x8] sm:$0xff] %vm83, %v1087
  %1212 = vst.msk [vmem:[%s7 + $0x10] sm:$0xff] %vm83, %v1092
  %1213 = vst.msk [vmem:[%s7 + $0x18] sm:$0xff] %vm83, %v1095
  %1214 = vst.msk [vmem:[%s7 + $0x20] sm:$0xff] %vm83, %v1100
  %1215 = vst.msk [vmem:[%s7 + $0x28] sm:$0xff] %vm83, %v1103
  %1216 = vst.msk [vmem:[%s7 + $0x30] sm:$0xff] %vm83, %v1108
  %1217 = vst.msk [vmem:[%s7 + $0x38] sm:$0xff] %vm83, %v1111
  %1218 = vst.msk [vmem:[%s7 + $0x40] sm:$0xff] %vm83, %v1116
  %1219 = vst.msk [vmem:[%s7 + $0x48] sm:$0xff] %vm83, %v1119
  %1220 = vst.msk [vmem:[%s7 + $0x50] sm:$0xff] %vm83, %v1124
  %1221 = vst.msk [vmem:[%s7 + $0x58] sm:$0xff] %vm83, %v1127
  %1222 = vst.msk [vmem:[%s7 + $0x60] sm:$0xff] %vm83, %v1132
  %1223 = vst.msk [vmem:[%s7 + $0x68] sm:$0xff] %vm83, %v1135
  %1224 = vst.msk [vmem:[%s7 + $0x70] sm:$0xff] %vm83, %v1140
  %1225 = vst.msk [vmem:[%s7 + $0x78] sm:$0xff] %vm83, %v1143
  %1226 = vst.msk [vmem:[%s7 + $0x80] sm:$0xff] %vm83, %v1148
  %1227 = vst.msk [vmem:[%s7 + $0x88] sm:$0xff] %vm83, %v1151
  %1228 = vst.msk [vmem:[%s7 + $0x90] sm:$0xff] %vm83, %v1156
  %1229 = vst.msk [vmem:[%s7 + $0x98] sm:$0xff] %vm83, %v1159
  %1230 = vst.msk [vmem:[%s7 + $0xa0] sm:$0xff] %vm83, %v1164
  %1231 = vst.msk [vmem:[%s7 + $0xa8] sm:$0xff] %vm83, %v1167
  %1232 = vst.msk [vmem:[%s7 + $0xb0] sm:$0xff] %vm83, %v1172
  %1233 = vst.msk [vmem:[%s7 + $0xb8] sm:$0xff] %vm83, %v1175
  %1234 = vst.msk [vmem:[%s7 + $0xc0] sm:$0xff] %vm83, %v1180
  %1235 = vst.msk [vmem:[%s7 + $0xc8] sm:$0xff] %vm83, %v1183
  %1236 = vst.msk [vmem:[%s7 + $0xd0] sm:$0xff] %vm83, %v1188
  %1237 = vst.msk [vmem:[%s7 + $0xd8] sm:$0xff] %vm83, %v1191
  %1238 = vst.msk [vmem:[%s7 + $0xe0] sm:$0xff] %vm83, %v1196
  %1239 = vst.msk [vmem:[%s7 + $0xe8] sm:$0xff] %vm83, %v1199
  %1240 = vst.msk [vmem:[%s7 + $0xf0] sm:$0xff] %vm83, %v1204
  %1241 = vst.msk [vmem:[%s7 + $0xf8] sm:$0xff] %vm83, %v1207
  // Predicated region
  $region30: #{fcnet_forward.1} parent=0 // pred_check
    _
  $region31: #{fcnet_forward.1} parent=0 // pred_check_branch
    %1243 = sbr.rel (0) target = $region33
  $region32: #{fcnet_forward.1} parent=0 // pred_region
    _
  $region33: #{fcnet_forward.1} parent=0 // pred_fallthru
    _
  // Predicated region
  $region34: #{fcnet_forward.1} parent=0 // pred_check
    _
  $region35: #{fcnet_forward.1} parent=0 // pred_check_branch
    %1245 = sbr.rel (0) target = $region37
  $region36: #{fcnet_forward.1} parent=0 // pred_region
    _
  $region37: #{fcnet_forward.1} parent=0 // pred_fallthru
    _

</llo_original>
